<compile_context>
chip_gen: v7x
topology: tpu7x:2x2x1
jax: 0.10.0
libtpu: 0.0.40
codegen_flags: <defaults>
</compile_context>

<pallas_src>
import functools

import jax
import jax.numpy as jnp
import numpy as np
from jax import lax
from jax.experimental import pallas as pl
from jax.experimental.pallas import tpu as pltpu


_VMEM_LIMIT = 32 * 1024 * 1024  # safe on v5e/v6e/v7x; ~20 MiB worst-case plan fits


def _round_up(x, m):
    return -(-x // m) * m


def _pad_rows(a, rows):
    if a.shape[0] == rows:
        return a
    return jnp.pad(a, ((0, rows - a.shape[0]), (0, 0)))


def _pad_axis(a, axis, target):
    pad = [(0, 0)] * a.ndim
    pad[axis] = (0, target - a.shape[axis])
    return jnp.pad(a, pad)


# ----------------------------------------------------------------------------
# Pallas kernels 1: fused matmul + folded-BN bias (+ residual | + fused
# downsample matmul) + ReLU.  Used for conv1, conv3 and the downsample conv.
# ----------------------------------------------------------------------------
def _mm_bias_relu_kernel(x_ref, w_ref, b_ref, o_ref, *, relu):
    acc = jnp.dot(x_ref[...], w_ref[...], preferred_element_type=jnp.float32)
    y = acc + b_ref[...]
    if relu:
        y = jnp.maximum(y, 0.0)
    o_ref[...] = y.astype(o_ref.dtype)


def _mm_bias_res_relu_kernel(x_ref, w_ref, b_ref, res_ref, o_ref):
    acc = jnp.dot(x_ref[...], w_ref[...], preferred_element_type=jnp.float32)
    y = jnp.maximum(acc + b_ref[...] + res_ref[...].astype(jnp.float32), 0.0)
    o_ref[...] = y.astype(o_ref.dtype)


def _mm_bias_ds_relu_kernel(x_ref, w_ref, b_ref, xs_ref, wds_ref, o_ref):
    # conv3 + downsample fused: relu(x@W3 + x_s@Wds + (b3 + bds))
    acc = jnp.dot(x_ref[...], w_ref[...], preferred_element_type=jnp.float32)
    acc = acc + jnp.dot(xs_ref[...], wds_ref[...],
                        preferred_element_type=jnp.float32)
    y = jnp.maximum(acc + b_ref[...], 0.0)
    o_ref[...] = y.astype(o_ref.dtype)


def fused_matmul_bias(x2d, w, bias, *, relu=True, residual=None, ds=None,
                      tm_max=512):
    """out = relu((x2d @ w) + bias [+ residual | + xs @ wds]).

    x2d:  (M, K)  bf16, K padded to a 128-multiple
    w:    (K, N)  bf16 with BN scale folded in, N padded to 128-multiple
    bias: (1, N)  f32 (folded BN bias; for the ds path b3+bds combined)
    residual: optional (M, N) bf16 added in f32 before the ReLU
    ds:   optional (xs2d (M, Ks) bf16, wds (Ks, N) bf16) fused second matmul
    """
    M, K = x2d.shape
    _, N = w.shape
    assert K % 128 == 0 and N % 128 == 0

    tm = min(tm_max, _round_up(M, 128))
    Mp = _round_up(M, tm)
    xp = _pad_rows(x2d, Mp)

    args = [xp, w, bias]
    in_specs = [
        pl.BlockSpec((tm, K), lambda i: (i, 0)),   # activation tile (pipelined)
        pl.BlockSpec((K, N), lambda i: (0, 0)),    # weight: VMEM-resident
        pl.BlockSpec((1, N), lambda i: (0, 0)),    # folded-BN bias
    ]
    if ds is not None:
        xs2d, wds = ds
        Ks = xs2d.shape[1]
        args += [_pad_rows(xs2d, Mp), wds]
        in_specs += [pl.BlockSpec((tm, Ks), lambda i: (i, 0)),
                     pl.BlockSpec((Ks, N), lambda i: (0, 0))]
        kernel = _mm_bias_ds_relu_kernel
    elif residual is not None:
        args.append(_pad_rows(residual, Mp))
        in_specs.append(pl.BlockSpec((tm, N), lambda i: (i, 0)))
        kernel = _mm_bias_res_relu_kernel
    else:
        kernel = functools.partial(_mm_bias_relu_kernel, relu=relu)

    out = pl.pallas_call(
        kernel,
        out_shape=jax.ShapeDtypeStruct((Mp, N), jnp.bfloat16),
        grid=(Mp // tm,),
        in_specs=in_specs,
        out_specs=pl.BlockSpec((tm, N), lambda i: (i, 0)),
        compiler_params=pltpu.CompilerParams(
            dimension_semantics=("parallel",),
            vmem_limit_bytes=_VMEM_LIMIT),
    )(*args)
    return out[:M]


# ----------------------------------------------------------------------------
# Pallas kernel 2: 3x3 conv (padding=1, stride s) + folded BN + ReLU.
#
# The padded input is split (in cheap XLA glue) into s*s spatial "phases"
# (phase[p,q][i,j] = x_pad[s*i+p, s*j+q]) and each phase is flattened so every
# tap (kh,kw) is one CONTIGUOUS, 8-aligned-start row-slice of one phase.  The
# kernel accumulates 9 matmuls in f32, applies bias+ReLU, and stores compact
# wo-wide rows (the halo columns never reach HBM).
# ----------------------------------------------------------------------------
def _conv3x3_bn_relu_kernel(ph_ref, w_ref, bias_ref, o_ref, *,
                            stride, tr, wph, wo):
    rows = tr * wph                              # flat rows computed this tile
    r0 = pl.multiple_of(pl.program_id(1) * rows, 8)   # wph % 8 == 0 -> aligned
    cout_p = o_ref.shape[-1]
    acc = jnp.zeros((rows, cout_p), jnp.float32)
    for kh in range(3):
        for kw in range(3):
            p, q = kh % stride, kw % stride
            dh, dw = kh // stride, kw // stride
            lhs = ph_ref[0, p * stride + q, pl.ds(r0 + dh * wph + dw, rows), :]
            acc = acc + jnp.dot(lhs, w_ref[kh * 3 + kw],
                                preferred_element_type=jnp.float32)
    y = jnp.maximum(acc + bias_ref[...], 0.0).astype(o_ref.dtype)
    # Compact store: drop the (wph - wo) halo columns here so downstream stages
    # never see or re-copy them.
    for r in range(tr):
        o_ref[0, r * wo:(r + 1) * wo, :] = y[r * wph:r * wph + wo, :]


def _make_phases_flat(x_nhwc, stride):
    """XLA glue: pad=1, split into stride*stride phases, flatten spatially.

    wph is rounded up to a multiple of 8 so in-kernel tap slices start on
    sublane boundaries."""
    n, h, w, c = x_nhwc.shape
    xp = jnp.pad(x_nhwc, ((0, 0), (1, 1), (1, 1), (0, 0)))
    ho = (h - 1) // stride + 1
    wo = (w - 1) // stride + 1
    e = 2 // stride                       # halo extent in phase coordinates
    hph = ho + e
    wph = _round_up(wo + e, 8)
    phases = []
    for p in range(stride):
        for q in range(stride):
            ph = xp[:, p::stride, q::stride, :][:, :hph, :wph, :]
            # +1 zero row so the last tap's slice stays in bounds
            ph = jnp.pad(ph, ((0, 0), (0, hph + 1 - ph.shape[1]),
                              (0, wph - ph.shape[2]), (0, 0)))
            phases.append(ph.reshape(n, (hph + 1) * wph, c))
    return jnp.stack(phases, axis=1), ho, wo, wph   # (N, s*s, Lp, C)


def _pick_row_tile(ho, wo, wph, cout_p, acc_limit=512 * 1024):
    """Largest tr dividing ho s.t. the f32 accumulator stays <= acc_limit and
    the compact output block (tr*wo) is 8-aligned (or full)."""
    for tr in range(ho, 0, -1):
        if ho % tr:
            continue
        aligned = (tr * wo) % 8 == 0 or tr == ho
        small_acc = tr * wph * cout_p * 4 <= acc_limit
        if aligned and small_acc:
            return tr
    return ho


def conv3x3_bn_relu(phases, w9, bias, *, stride, ho, wo, wph):
    n, ss, lp, cin_p = phases.shape
    cout_p = w9.shape[-1]
    tr = _pick_row_tile(ho, wo, wph, cout_p)
    kernel = functools.partial(_conv3x3_bn_relu_kernel,
                               stride=stride, tr=tr, wph=wph, wo=wo)
    out = pl.pallas_call(
        kernel,
        out_shape=jax.ShapeDtypeStruct((n, ho * wo, cout_p), jnp.bfloat16),
        grid=(n, ho // tr),
        in_specs=[
            # full (phase-split) image stays resident across the row-tile axis
            pl.BlockSpec((1, ss, lp, cin_p), lambda b, r: (b, 0, 0, 0)),
            pl.BlockSpec((9, cin_p, cout_p), lambda b, r: (0, 0, 0)),
            pl.BlockSpec((1, cout_p), lambda b, r: (0, 0)),
        ],
        out_specs=pl.BlockSpec((1, tr * wo, cout_p), lambda b, r: (b, r, 0)),
        compiler_params=pltpu.CompilerParams(
            # disjoint output blocks -> both axes parallel (dual-TC friendly)
            dimension_semantics=("parallel", "parallel"),
            vmem_limit_bytes=_VMEM_LIMIT),
    )(phases, w9, bias)
    return out   # (N, ho*wo, cout_p), compact


# ----------------------------------------------------------------------------
# Parameter prep: fold BN into weights (in f32), pad channels to 128, cast bf16
# ----------------------------------------------------------------------------
def fold_bn(gamma, beta, mean, var, eps=1e-5):
    scale = gamma / jnp.sqrt(var + eps)
    bias = beta - mean * scale
    return scale, bias


def prepare_kernel_params(raw, inplanes, planes):
    exp = 4
    cout = planes * exp
    cin_p = _round_up(inplanes, 128)
    c1_p = _round_up(planes, 128)
    cout_p = _round_up(cout, 128)

    def prep_1x1(w_oihw, bn, kin_p, kout_p):
        s, b = fold_bn(*bn)
        w2d = w_oihw[:, :, 0, 0].T * s[None, :]           # fold in f32
        w2d = _pad_axis(_pad_axis(w2d, 0, kin_p), 1, kout_p).astype(jnp.bfloat16)
        b2d = _pad_axis(b.reshape(1, -1), 1, kout_p).astype(jnp.float32)
        return w2d, b2d

    w1, b1 = prep_1x1(raw["conv1"], raw["bn1"], cin_p, c1_p)
    w3, b3 = prep_1x1(raw["conv3"], raw["bn3"], c1_p, cout_p)

    s2, b2v = fold_bn(*raw["bn2"])
    w2 = jnp.transpose(raw["conv2"], (2, 3, 1, 0)).reshape(9, planes, planes)
    w2 = w2 * s2[None, None, :]                            # fold in f32
    w2 = _pad_axis(_pad_axis(w2, 1, c1_p), 2, c1_p).astype(jnp.bfloat16)
    b2 = _pad_axis(b2v.reshape(1, -1), 1, c1_p).astype(jnp.float32)

    kp = dict(w1=w1, b1=b1, w2=w2, b2=b2, w3=w3, b3=b3,
              cin=inplanes, cout=cout, cin_p=cin_p, c1_p=c1_p, cout_p=cout_p,
              has_ds="conv_ds" in raw)
    if kp["has_ds"]:
        kp["wds"], bds = prep_1x1(raw["conv_ds"], raw["bn_ds"], cin_p, cout_p)
        kp["b3ds"] = b3 + bds          # combined bias for the fused conv3+ds
    return kp


# ----------------------------------------------------------------------------
# Bottleneck forward (NCHW in/out, like the PyTorch module; inference BN)
# ----------------------------------------------------------------------------
def bottleneck_forward(x_nchw, kp, stride):
    # layout passes in bf16 (halves HBM traffic of the transposes/pads)
    x = jnp.transpose(x_nchw.astype(jnp.bfloat16), (0, 2, 3, 1))   # NHWC bf16
    n, h, w, cin = x.shape
    cin_p, c1_p, cout_p, cout = kp["cin_p"], kp["c1_p"], kp["cout_p"], kp["cout"]
    x_p = jnp.pad(x, ((0, 0), (0, 0), (0, 0), (0, cin_p - cin)))

    # conv1 (1x1) + bn1 + relu
    out1 = fused_matmul_bias(x_p.reshape(n * h * w, cin_p), kp["w1"], kp["b1"],
                             relu=True)
    out1 = out1.reshape(n, h, w, c1_p)

    # conv2 (3x3, stride, pad=1) + bn2 + relu — fused 9-tap kernel, no im2col,
    # compact (halo-free) output.
    phases, ho, wo, wph = _make_phases_flat(out1, stride)
    out2 = conv3x3_bn_relu(phases, kp["w2"], kp["b2"],
                           stride=stride, ho=ho, wo=wo, wph=wph)
    x2 = out2.reshape(n * ho * wo, c1_p)

    # conv3 (1x1) + bn3 + residual add + relu
    if kp["has_ds"]:
        # downsample 1x1 conv fused into the conv3 kernel (no HBM identity)
        x_s = x_p[:, ::stride, ::stride, :].reshape(n * ho * wo, cin_p)
        out3 = fused_matmul_bias(x2, kp["w3"], kp["b3ds"],
                                 ds=(x_s, kp["wds"]))
    else:
        identity = x_p.reshape(n * h * w, cin_p)           # cin_p == cout_p
        out3 = fused_matmul_bias(x2, kp["w3"], kp["b3"], residual=identity)

    out3 = out3.reshape(n, ho, wo, cout_p)[..., :cout]
    return jnp.transpose(out3, (0, 3, 1, 2)).astype(jnp.float32)   # NCHW f32


# ----------------------------------------------------------------------------
# Pure-JAX (lax.conv, f32) reference for correctness checking
# ----------------------------------------------------------------------------
def bottleneck_reference(x_nchw, raw, stride):
    def conv(x, w_oihw, s):
        return lax.conv_general_dilated(
            x, w_oihw, window_strides=(s, s),
            padding="VALID" if w_oihw.shape[-1] == 1 else [(1, 1), (1, 1)],
            dimension_numbers=("NCHW", "OIHW", "NCHW"))

    def bn(x, p):
        g, b, m, v = p
        sc = g / jnp.sqrt(v + 1e-5)
        return x * sc[None, :, None, None] + (b - m * sc)[None, :, None, None]

    out = jax.nn.relu(bn(conv(x_nchw, raw["conv1"], 1), raw["bn1"]))
    out = jax.nn.relu(bn(conv(out, raw["conv2"], stride), raw["bn2"]))
    out = bn(conv(out, raw["conv3"], 1), raw["bn3"])
    if "conv_ds" in raw:
        identity = bn(conv(x_nchw, raw["conv_ds"], stride), raw["bn_ds"])
    else:
        identity = x_nchw
    return jax.nn.relu(out + identity)


# ----------------------------------------------------------------------------
# Deterministic parameter construction
# ----------------------------------------------------------------------------
def make_raw_params(key, inplanes, planes, stride):
    exp = 4
    ks = jax.random.split(key, 8)

    def w(k, shape, fan_in):
        return jax.random.normal(k, shape, jnp.float32) / np.sqrt(fan_in)

    def bn_params(k, c):
        k1, k2, k3, k4 = jax.random.split(k, 4)
        gamma = 1.0 + 0.1 * jax.random.normal(k1, (c,), jnp.float32)
        beta = 0.1 * jax.random.normal(k2, (c,), jnp.float32)
        mean = 0.05 * jax.random.normal(k3, (c,), jnp.float32)
        var = jnp.abs(jax.random.normal(k4, (c,), jnp.float32)) + 0.5
        return (gamma, beta, mean, var)

    raw = {
        "conv1": w(ks[0], (planes, inplanes, 1, 1), inplanes),          # OIHW
        "conv2": w(ks[1], (planes, planes, 3, 3), planes * 9),
        "conv3": w(ks[2], (planes * exp, planes, 1, 1), planes),
        "bn1": bn_params(ks[3], planes),
        "bn2": bn_params(ks[4], planes),
        "bn3": bn_params(ks[5], planes * exp),
    }
    if stride != 1 or inplanes != planes * exp:
        raw["conv_ds"] = w(ks[6], (planes * exp, inplanes, 1, 1), inplanes)
        raw["bn_ds"] = bn_params(ks[7], planes * exp)
    return raw


# ----------------------------------------------------------------------------
if __name__ == "__main__":
    key = jax.random.PRNGKey(0)
    configs = [
        # (batch, inplanes, planes, stride, hw)
        (2, 8, 4, 2, 8),        # small: stride-2, downsample, 4-phase path
        (2, 16, 4, 1, 8),       # small: stride-1, identity passthrough
        (1, 64, 64, 1, 56),     # ResNet-50 layer1[0]: M-tiling, tr < ho, ds fusion
        (1, 256, 128, 2, 56),   # ResNet-50 layer2[0]: stride-2, wide channels
    ]
    for idx, (batch, inplanes, planes, stride, hw) in enumerate(configs):
        kx, kw_key = jax.random.split(jax.random.fold_in(key, idx))
        x = jax.random.normal(kx, (batch, inplanes, hw, hw), jnp.float32)  # NCHW

        raw = make_raw_params(kw_key, inplanes, planes, stride)
        kp = prepare_kernel_params(raw, inplanes, planes)

        out = jax.block_until_ready(bottleneck_forward(x, kp, stride))
        ref = jax.block_until_ready(bottleneck_reference(x, raw, stride))

        assert out.shape == ref.shape == (batch, planes * 4, hw // stride, hw // stride)
        # bf16 matmuls + bf16 inter-stage activations vs f32 reference.
        # Larger spatial/channel configs accumulate a bit more rounding error.
        tol = 5e-2 if hw <= 16 else 1e-1
        np.testing.assert_allclose(np.asarray(out), np.asarray(ref),
                                   rtol=tol, atol=tol)

    print("KERNEL_OK")
</pallas_src>

<mosaic_0001>
module attributes {stable_mosaic.version = 11 : i64} {
  func.func @_mm_bias_relu_kernel(%arg0: i32, %arg1: memref<128x128xbf16, #tpu.memory_space<vmem>>, %arg2: memref<128x128xbf16, #tpu.memory_space<vmem>>, %arg3: memref<1x128xf32, #tpu.memory_space<vmem>>, %arg4: memref<128x128xbf16, #tpu.memory_space<vmem>>) attributes {dimension_semantics = [#tpu.dimension_semantics<parallel>], iteration_bounds = array<i64: 1>, scalar_prefetch = 0 : i64, scratch_operands = 0 : i64, tpu.core_type = #tpu.core_type<tc>, window_params = [{transform_indices = @transform_0, window_bounds = array<i64: 128, 128>}, {pipeline_mode = #tpu.pipeline_mode<synchronous>, transform_indices = @transform_1, window_bounds = array<i64: 128, 128>}, {pipeline_mode = #tpu.pipeline_mode<synchronous>, transform_indices = @transform_2, window_bounds = array<i64: 1, 128>}, {transform_indices = @transform_3, window_bounds = array<i64: 128, 128>}]} {
    %c0 = arith.constant 0 : index
    %c0_0 = arith.constant 0 : index
    %0 = vector.load %arg1[%c0, %c0_0] : memref<128x128xbf16, #tpu.memory_space<vmem>>, vector<128x128xbf16>
    %c0_1 = arith.constant 0 : index
    %c0_2 = arith.constant 0 : index
    %1 = vector.load %arg2[%c0_1, %c0_2] : memref<128x128xbf16, #tpu.memory_space<vmem>>, vector<128x128xbf16>
    %cst = arith.constant dense<0.000000e+00> : vector<128x128xf32>
    %2 = tpu.matmul %0, %1, %cst {dimension_numbers = #tpu.dot_dimension_numbers<[1], [0], [0], [1], [0, 0, 1, 1], [], []>} : vector<128x128xbf16>, vector<128x128xbf16>, vector<128x128xf32> -> vector<128x128xf32>
    %c0_3 = arith.constant 0 : index
    %c0_4 = arith.constant 0 : index
    %3 = vector.load %arg3[%c0_3, %c0_4] : memref<1x128xf32, #tpu.memory_space<vmem>>, vector<1x128xf32>
    %4 = vector.broadcast %3 : vector<1x128xf32> to vector<128x128xf32>
    %5 = arith.addf %2, %4 : vector<128x128xf32>
    %cst_5 = arith.constant 0.000000e+00 : f32
    %6 = vector.broadcast %cst_5 : f32 to vector<128x128xf32>
    %7 = arith.maximumf %5, %6 : vector<128x128xf32>
    %8 = arith.truncf %7 : vector<128x128xf32> to vector<128x128xbf16>
    %c0_6 = arith.constant 0 : index
    %c0_7 = arith.constant 0 : index
    %9 = vector.load %arg4[%c0_6, %c0_7] : memref<128x128xbf16, #tpu.memory_space<vmem>>, vector<128x128xbf16>
    tpu.vector_store %arg4[%c0_6, %c0_7], %8 {strides = array<i32>} : memref<128x128xbf16, #tpu.memory_space<vmem>>, vector<128x128xbf16>,
    return
  }
  func.func @transform_0(%arg0: i32) -> (i32, i32) {
    %c0_i32 = arith.constant 0 : i32
    %c0_i32_0 = arith.constant 0 : i32
    return %arg0, %c0_i32 : i32, i32
  }
  func.func @transform_1(%arg0: i32) -> (i32, i32) {
    %c0_i32 = arith.constant 0 : i32
    %c0_i32_0 = arith.constant 0 : i32
    %c0_i32_1 = arith.constant 0 : i32
    return %c0_i32, %c0_i32_0 : i32, i32
  }
  func.func @transform_2(%arg0: i32) -> (i32, i32) {
    %c0_i32 = arith.constant 0 : i32
    %c0_i32_0 = arith.constant 0 : i32
    %c0_i32_1 = arith.constant 0 : i32
    return %c0_i32, %c0_i32_0 : i32, i32
  }
  func.func @transform_3(%arg0: i32) -> (i32, i32) {
    %c0_i32 = arith.constant 0 : i32
    %c0_i32_0 = arith.constant 0 : i32
    return %arg0, %c0_i32 : i32, i32
  }
}

</mosaic_0001>

<llo_original>
// kernel: tpu_custom_call.1
$region0: #{tpu_custom_call.1}
  #allocation0 [shape = 'u32[]', space=smem, size = 0x4, offset = 0x4, fixed_abs, tag = 'smem constant byte address 0x4 - core index']
  #allocation1 [shape = 'u32[144,128]{1,0:T(1,128)}', space=vmem, size = 0x12000, scoped, tag = 'internal scratch']
  %s0 = inlined_call_operand.hbm [shape: bf16[128,128], index: 0, kind: input, shape index: {}]
  %s1 = inlined_call_operand.hbm [shape: bf16[128,128], index: 1, kind: input, shape index: {}]
  %s2 = inlined_call_operand.vmem [shape: f32[1,128], index: 2, kind: input, shape index: {}]
  %s3 = inlined_call_operand.hbm [shape: bf16[128,128], index: 3, kind: output, shape index: {}]
  %s4 = sld [smem:[#allocation0]]
  $region30: #{tpu_custom_call.1} parent=0
    _
  %s6 = ssub.s32 1, %s4
  %s7 = scalar_select 0, %s6, %s4
  $region1: #{tpu_custom_call.1} parent=0
    #allocation2 [shape = 'u8[32768]{0}', space=vmem, size = 0x8000, scoped, tag = 'input window, operand 0, single buffered']
    #allocation3 [shape = 's32[1]{0}', space=sflag, size = 0x4, scoped, tag = 'scoped memory for tpu_custom_call.1']
    #allocation4 [shape = 's32[1]{0}', space=sflag, size = 0x4, scoped, tag = 'scoped memory for tpu_custom_call.1']
    #allocation5 [shape = 'u8[32768]{0}', space=vmem, size = 0x8000, scoped, tag = 'input window, operand 1, single buffered']
    #allocation6 [shape = 's32[1]{0}', space=sflag, size = 0x4, scoped, tag = 'scoped memory for tpu_custom_call.1']
    #allocation7 [shape = 'u8[32768]{0}', space=vmem, size = 0x8000, scoped, tag = 'output window, operand 0, single buffered']
    %8 = vsyncpa [#allocation3], 0
    %9 = vsyncpa [#allocation6], 0
    %10 = vsyncpa [#allocation4], 0
    // Predicated region
    $region2: #{tpu_custom_call.1} parent=1 // pred_check
      _
    $region3: #{tpu_custom_call.1} parent=1 // pred_check_branch
      %12 = sbr.rel (0) target = $region5
    $region4: #{tpu_custom_call.1} parent=1 // pred_region
      %s14 = ssub.s32 1024, 1024
      %15 = vsyncadd [#allocation3], %s14
      %s16 = sshll.u32 [#allocation2], 4
      %s17 = int_to_ptr.vmem [resolvable:$true] %s16
      %22 = dma.hbm_to_vmem [thread:$0]  %s0, 1024, %s17, [#allocation3], 64, 64, 4
    $region5: #{tpu_custom_call.1} parent=1 // pred_fallthru
      _
    // Predicated region
    $region6: #{tpu_custom_call.1} parent=1 // pred_check
      _
    $region7: #{tpu_custom_call.1} parent=1 // pred_check_branch
      %24 = sbr.rel (0) target = $region9
    $region8: #{tpu_custom_call.1} parent=1 // pred_region
      %s26 = ssub.s32 1024, 1024
      %27 = vsyncadd [#allocation6], %s26
      %s28 = sshll.u32 [#allocation5], 4
      %s29 = int_to_ptr.vmem [resolvable:$true] %s28
      %34 = dma.hbm_to_vmem [thread:$0]  %s1, 1024, %s29, [#allocation6], 64, 64, 4
    $region9: #{tpu_custom_call.1} parent=1 // pred_fallthru
      _
    // Predicated region
    $region10: #{tpu_custom_call.1} parent=1 // pred_check
      _
    $region11: #{tpu_custom_call.1} parent=1 // pred_check_branch
      %36 = sbr.rel (0) target = $region13
    $region12: #{tpu_custom_call.1} parent=1 // pred_region
      _
    $region13: #{tpu_custom_call.1} parent=1 // pred_fallthru
      _
    // Predicated region
    $region14: #{tpu_custom_call.1} parent=1 // pred_check
      _
    $region15: #{tpu_custom_call.1} parent=1 // pred_check_branch
      %38 = sbr.rel (0) target = $region17
    $region16: #{tpu_custom_call.1} parent=1 // pred_region
      %39 = dma.done [#allocation3], 1024
    $region17: #{tpu_custom_call.1} parent=1 // pred_fallthru
      _
    // Predicated region
    $region18: #{tpu_custom_call.1} parent=1 // pred_check
      _
    $region19: #{tpu_custom_call.1} parent=1 // pred_check_branch
      %41 = sbr.rel (0) target = $region21
    $region20: #{tpu_custom_call.1} parent=1 // pred_region
      %42 = dma.done [#allocation6], 1024
    $region21: #{tpu_custom_call.1} parent=1 // pred_fallthru
      _
    %v44 = vld [vmem:[#allocation2] sm:$0xf]
    %v45 = vld [vmem:[#allocation2 + $0x4] sm:$0xf]
    %v46 = vld [vmem:[#allocation2 + $0x8] sm:$0xf]
    %v47 = vld [vmem:[#allocation2 + $0xc] sm:$0xf]
    %v48 = vld [vmem:[#allocation2 + $0x10] sm:$0xf]
    %v49 = vld [vmem:[#allocation2 + $0x14] sm:$0xf]
    %v50 = vld [vmem:[#allocation2 + $0x18] sm:$0xf]
    %v51 = vld [vmem:[#allocation2 + $0x1c] sm:$0xf]
    %v52 = vld [vmem:[#allocation2 + $0x20] sm:$0xf]
    %v53 = vld [vmem:[#allocation2 + $0x24] sm:$0xf]
    %v54 = vld [vmem:[#allocation2 + $0x28] sm:$0xf]
    %v55 = vld [vmem:[#allocation2 + $0x2c] sm:$0xf]
    %v56 = vld [vmem:[#allocation2 + $0x30] sm:$0xf]
    %v57 = vld [vmem:[#allocation2 + $0x34] sm:$0xf]
    %v58 = vld [vmem:[#allocation2 + $0x38] sm:$0xf]
    %v59 = vld [vmem:[#allocation2 + $0x3c] sm:$0xf]
    %v60 = vld [vmem:[#allocation5] sm:$0xf]
    %v61 = vld [vmem:[#allocation5 + $0x4] sm:$0xf]
    %v62 = vld [vmem:[#allocation5 + $0x8] sm:$0xf]
    %v63 = vld [vmem:[#allocation5 + $0xc] sm:$0xf]
    %v64 = vld [vmem:[#allocation5 + $0x10] sm:$0xf]
    %v65 = vld [vmem:[#allocation5 + $0x14] sm:$0xf]
    %v66 = vld [vmem:[#allocation5 + $0x18] sm:$0xf]
    %v67 = vld [vmem:[#allocation5 + $0x1c] sm:$0xf]
    %v68 = vld [vmem:[#allocation5 + $0x20] sm:$0xf]
    %v69 = vld [vmem:[#allocation5 + $0x24] sm:$0xf]
    %v70 = vld [vmem:[#allocation5 + $0x28] sm:$0xf]
    %v71 = vld [vmem:[#allocation5 + $0x2c] sm:$0xf]
    %v72 = vld [vmem:[#allocation5 + $0x30] sm:$0xf]
    %v73 = vld [vmem:[#allocation5 + $0x34] sm:$0xf]
    %v74 = vld [vmem:[#allocation5 + $0x38] sm:$0xf]
    %v75 = vld [vmem:[#allocation5 + $0x3c] sm:$0xf]
    %v76 = vld [vmem:[%s2] sm:$0x1]
    %v78 = vlaneseq
    %v79 = vshrl.u32 %v78, 7
    %v80 = vsub.s32 0, %v79
    %v81 = vrot.slane %v76, %v80
    %v99 = vunpack.c.l.b16 %v44
    %v100 = vunpack.c.l.b16 %v45
    %v101 = vunpack.c.l.b16 %v46
    %v102 = vunpack.c.l.b16 %v47
    %v103 = vunpack.c.l.b16 %v48
    %v104 = vunpack.c.l.b16 %v49
    %v105 = vunpack.c.l.b16 %v50
    %v106 = vunpack.c.l.b16 %v51
    %v107 = vunpack.c.l.b16 %v52
    %v108 = vunpack.c.l.b16 %v53
    %v109 = vunpack.c.l.b16 %v54
    %v110 = vunpack.c.l.b16 %v55
    %v111 = vunpack.c.l.b16 %v56
    %v112 = vunpack.c.l.b16 %v57
    %v113 = vunpack.c.l.b16 %v58
    %v114 = vunpack.c.l.b16 %v59
    %v115 = vpack.c.b16 %v100, %v99
    %v116 = vpack.c.b16 %v102, %v101
    %v117 = vpack.c.b16 %v104, %v103
    %v118 = vpack.c.b16 %v106, %v105
    %v119 = vpack.c.b16 %v108, %v107
    %v120 = vpack.c.b16 %v110, %v109
    %v121 = vpack.c.b16 %v112, %v111
    %v122 = vpack.c.b16 %v114, %v113
    %v147 = vunpack.c.l.b16 %v60
    %v148 = vunpack.c.l.b16 %v61
    %v149 = vunpack.c.l.b16 %v62
    %v150 = vunpack.c.l.b16 %v63
    %v151 = vunpack.c.l.b16 %v64
    %v152 = vunpack.c.l.b16 %v65
    %v153 = vunpack.c.l.b16 %v66
    %v154 = vunpack.c.l.b16 %v67
    %v155 = vunpack.c.l.b16 %v68
    %v156 = vunpack.c.l.b16 %v69
    %v157 = vunpack.c.l.b16 %v70
    %v158 = vunpack.c.l.b16 %v71
    %v159 = vunpack.c.l.b16 %v72
    %v160 = vunpack.c.l.b16 %v73
    %v161 = vunpack.c.l.b16 %v74
    %v162 = vunpack.c.l.b16 %v75
    %v163 = vpack.c.b16 %v148, %v147
    %v164 = vpack.c.b16 %v150, %v149
    %v165 = vpack.c.b16 %v152, %v151
    %v166 = vpack.c.b16 %v154, %v153
    %v167 = vpack.c.b16 %v156, %v155
    %v168 = vpack.c.b16 %v158, %v157
    %v169 = vpack.c.b16 %v160, %v159
    %v170 = vpack.c.b16 %v162, %v161
    %179 = vmatprep.subr.bf16.mxu0 0
    %180 = vmatpush1.bf16.msra.mxu0 %v163
    %181 = vmatprep.subr.bf16.mxu0 0
    %182 = vmatpush1.bf16.msra.mxu0 %v164
    %183 = vmatprep.subr.bf16.mxu0 0
    %184 = vmatpush1.bf16.msra.mxu0 %v165
    %185 = vmatprep.subr.bf16.mxu0 0
    %186 = vmatpush1.bf16.msra.mxu0 %v166
    %187 = vmatprep.subr.bf16.mxu0 0
    %188 = vmatpush1.bf16.msra.mxu0 %v167
    %189 = vmatprep.subr.bf16.mxu0 0
    %190 = vmatpush1.bf16.msra.mxu0 %v168
    %191 = vmatprep.subr.bf16.mxu0 0
    %192 = vmatpush1.bf16.msra.mxu0 %v169
    %193 = vmatprep.subr.bf16.mxu0 0
    %194 = vmatpush1.bf16.msra.mxu0 %v170
    %195 = vmatprep.subr.bf16.mxu0 0
    %196 = vmatpush1.bf16.msra.mxu0 0
    %197 = vmatprep.subr.bf16.mxu0 0
    %198 = vmatpush1.bf16.msra.mxu0 0
    %199 = vmatprep.subr.bf16.mxu0 0
    %200 = vmatpush1.bf16.msra.mxu0 0
    %201 = vmatprep.subr.bf16.mxu0 0
    %202 = vmatpush1.bf16.msra.mxu0 0
    %203 = vmatprep.subr.bf16.mxu0 0
    %204 = vmatpush1.bf16.msra.mxu0 0
    %205 = vmatprep.subr.bf16.mxu0 0
    %206 = vmatpush1.bf16.msra.mxu0 0
    %207 = vmatprep.subr.bf16.mxu0 0
    %208 = vmatpush1.bf16.msra.mxu0 0
    %209 = vmatprep.subr.bf16.mxu0 0
    %210 = vmatpush1.bf16.msra.mxu0 0
    %211 = vmatprep.mubr.bf16.mxu0 0
    %212 = vmatmul.mubr.bf16.gmra.mrb[0].mxu0 %v115
    %v213 = vpop.f32.mrb[0].mxu0
    %v214 = vadd.f32 %v81, %v213
    %v215 = vpop.f32.mrb[0].mxu0
    %v216 = vpop.f32.mrb[0].mxu0
    %v217 = vadd.f32 %v81, %v216
    %v218 = vpop.f32.mrb[0].mxu0
    %219 = vmatprep.mubr.bf16.mxu0 0
    %220 = vmatmul.mubr.bf16.gmra.mrb[0].mxu0 %v116
    %v221 = vpop.f32.mrb[0].mxu0
    %v222 = vadd.f32 %v81, %v221
    %v223 = vpop.f32.mrb[0].mxu0
    %v224 = vpop.f32.mrb[0].mxu0
    %v225 = vadd.f32 %v81, %v224
    %v226 = vpop.f32.mrb[0].mxu0
    %227 = vmatprep.mubr.bf16.mxu0 0
    %228 = vmatmul.mubr.bf16.gmra.mrb[0].mxu0 %v117
    %v229 = vpop.f32.mrb[0].mxu0
    %v230 = vadd.f32 %v81, %v229
    %v231 = vpop.f32.mrb[0].mxu0
    %v232 = vpop.f32.mrb[0].mxu0
    %v233 = vadd.f32 %v81, %v232
    %v234 = vpop.f32.mrb[0].mxu0
    %235 = vmatprep.mubr.bf16.mxu0 0
    %236 = vmatmul.mubr.bf16.gmra.mrb[0].mxu0 %v118
    %v237 = vpop.f32.mrb[0].mxu0
    %v238 = vadd.f32 %v81, %v237
    %v239 = vpop.f32.mrb[0].mxu0
    %v240 = vpop.f32.mrb[0].mxu0
    %v241 = vadd.f32 %v81, %v240
    %v242 = vpop.f32.mrb[0].mxu0
    %243 = vmatprep.mubr.bf16.mxu0 0
    %244 = vmatmul.mubr.bf16.gmra.mrb[0].mxu0 %v119
    %v245 = vpop.f32.mrb[0].mxu0
    %v246 = vadd.f32 %v81, %v245
    %v247 = vpop.f32.mrb[0].mxu0
    %v248 = vpop.f32.mrb[0].mxu0
    %v249 = vadd.f32 %v81, %v248
    %v250 = vpop.f32.mrb[0].mxu0
    %251 = vmatprep.mubr.bf16.mxu0 0
    %252 = vmatmul.mubr.bf16.gmra.mrb[0].mxu0 %v120
    %v253 = vpop.f32.mrb[0].mxu0
    %v254 = vadd.f32 %v81, %v253
    %v255 = vpop.f32.mrb[0].mxu0
    %v256 = vpop.f32.mrb[0].mxu0
    %v257 = vadd.f32 %v81, %v256
    %v258 = vpop.f32.mrb[0].mxu0
    %259 = vmatprep.mubr.bf16.mxu0 0
    %260 = vmatmul.mubr.bf16.gmra.mrb[0].mxu0 %v121
    %v261 = vpop.f32.mrb[0].mxu0
    %v262 = vadd.f32 %v81, %v261
    %v263 = vpop.f32.mrb[0].mxu0
    %v264 = vpop.f32.mrb[0].mxu0
    %v265 = vadd.f32 %v81, %v264
    %v266 = vpop.f32.mrb[0].mxu0
    %267 = vmatprep.mubr.bf16.mxu0 0
    %268 = vmatmul.mubr.bf16.gmra.mrb[0].mxu0 %v122
    %v269 = vpop.f32.mrb[0].mxu0
    %v270 = vadd.f32 %v81, %v269
    %v271 = vpop.f32.mrb[0].mxu0
    %v272 = vpop.f32.mrb[0].mxu0
    %v273 = vadd.f32 %v81, %v272
    %v274 = vpop.f32.mrb[0].mxu0
    %275 = vdwg.mxu0
    %v276 = vmax.f32 %v214, 0.0
    %v277 = vmax.f32 %v217, 0.0
    %v278 = vmax.f32 %v222, 0.0
    %v279 = vmax.f32 %v225, 0.0
    %v280 = vmax.f32 %v230, 0.0
    %v281 = vmax.f32 %v233, 0.0
    %v282 = vmax.f32 %v238, 0.0
    %v283 = vmax.f32 %v241, 0.0
    %v284 = vmax.f32 %v246, 0.0
    %v285 = vmax.f32 %v249, 0.0
    %v286 = vmax.f32 %v254, 0.0
    %v287 = vmax.f32 %v257, 0.0
    %v288 = vmax.f32 %v262, 0.0
    %v289 = vmax.f32 %v265, 0.0
    %v290 = vmax.f32 %v270, 0.0
    %v291 = vmax.f32 %v273, 0.0
    %v292 = vpack.c.bf16 %v277, %v276
    %v293 = vpack.c.bf16 %v279, %v278
    %v294 = vpack.c.bf16 %v281, %v280
    %v295 = vpack.c.bf16 %v283, %v282
    %v296 = vpack.c.bf16 %v285, %v284
    %v297 = vpack.c.bf16 %v287, %v286
    %v298 = vpack.c.bf16 %v289, %v288
    %v299 = vpack.c.bf16 %v291, %v290
    %v308 = vunpack.c.l.b16 %v292
    %v309 = vunpack.c.h.b16 %v292
    %v310 = vunpack.c.l.b16 %v293
    %v311 = vunpack.c.h.b16 %v293
    %v312 = vunpack.c.l.b16 %v294
    %v313 = vunpack.c.h.b16 %v294
    %v314 = vunpack.c.l.b16 %v295
    %v315 = vunpack.c.h.b16 %v295
    %v316 = vunpack.c.l.b16 %v296
    %v317 = vunpack.c.h.b16 %v296
    %v318 = vunpack.c.l.b16 %v297
    %v319 = vunpack.c.h.b16 %v297
    %v320 = vunpack.c.l.b16 %v298
    %v321 = vunpack.c.h.b16 %v298
    %v322 = vunpack.c.l.b16 %v299
    %v323 = vunpack.c.h.b16 %v299
    %v324 = vpack.c.b16 %v308, %v308
    %v325 = vpack.c.b16 %v309, %v309
    %v326 = vpack.c.b16 %v310, %v310
    %v327 = vpack.c.b16 %v311, %v311
    %v328 = vpack.c.b16 %v312, %v312
    %v329 = vpack.c.b16 %v313, %v313
    %v330 = vpack.c.b16 %v314, %v314
    %v331 = vpack.c.b16 %v315, %v315
    %v332 = vpack.c.b16 %v316, %v316
    %v333 = vpack.c.b16 %v317, %v317
    %v334 = vpack.c.b16 %v318, %v318
    %v335 = vpack.c.b16 %v319, %v319
    %v336 = vpack.c.b16 %v320, %v320
    %v337 = vpack.c.b16 %v321, %v321
    %v338 = vpack.c.b16 %v322, %v322
    %v339 = vpack.c.b16 %v323, %v323
    %356 = vst [vmem:[#allocation7] sm:$0xf] %v324
    %357 = vst [vmem:[#allocation7 + $0x4] sm:$0xf] %v325
    %358 = vst [vmem:[#allocation7 + $0x8] sm:$0xf] %v326
    %359 = vst [vmem:[#allocation7 + $0xc] sm:$0xf] %v327
    %360 = vst [vmem:[#allocation7 + $0x10] sm:$0xf] %v328
    %361 = vst [vmem:[#allocation7 + $0x14] sm:$0xf] %v329
    %362 = vst [vmem:[#allocation7 + $0x18] sm:$0xf] %v330
    %363 = vst [vmem:[#allocation7 + $0x1c] sm:$0xf] %v331
    %364 = vst [vmem:[#allocation7 + $0x20] sm:$0xf] %v332
    %365 = vst [vmem:[#allocation7 + $0x24] sm:$0xf] %v333
    %366 = vst [vmem:[#allocation7 + $0x28] sm:$0xf] %v334
    %367 = vst [vmem:[#allocation7 + $0x2c] sm:$0xf] %v335
    %368 = vst [vmem:[#allocation7 + $0x30] sm:$0xf] %v336
    %369 = vst [vmem:[#allocation7 + $0x34] sm:$0xf] %v337
    %370 = vst [vmem:[#allocation7 + $0x38] sm:$0xf] %v338
    %371 = vst [vmem:[#allocation7 + $0x3c] sm:$0xf] %v339
    // Predicated region
    $region22: #{tpu_custom_call.1} parent=1 // pred_check
      _
    $region23: #{tpu_custom_call.1} parent=1 // pred_check_branch
      %373 = sbr.rel (0) target = $region25
    $region24: #{tpu_custom_call.1} parent=1 // pred_region
      %s375 = ssub.s32 1024, 1024
      %376 = vsyncadd [#allocation4], %s375
      %s377 = sshll.u32 [#allocation7], 4
      %s378 = int_to_ptr.vmem [resolvable:$true] %s377
      %383 = dma.vmem_to_hbm [thread:$0]  %s378, 1024, %s3, [#allocation4], 64, 64, 4
    $region25: #{tpu_custom_call.1} parent=1 // pred_fallthru
      _
    // Predicated region
    $region26: #{tpu_custom_call.1} parent=1 // pred_check
      _
    $region27: #{tpu_custom_call.1} parent=1 // pred_check_branch
      %385 = sbr.rel (0) target = $region29
    $region28: #{tpu_custom_call.1} parent=1 // pred_region
      %386 = dma.done [#allocation4], 1024
    $region29: #{tpu_custom_call.1} parent=1 // pred_fallthru
      _
    %387 = vsyncpa [#allocation3], 1
    %388 = vsyncpa [#allocation6], 1
    %389 = vsyncpa [#allocation4], 1

</llo_original>
